<compile_context>
chip_gen: v5e
topology: v5e:2x2
jax: 0.10.0
libtpu: 0.0.40
codegen_flags: <defaults>
</compile_context>

<pallas_src>
import jax
import jax.numpy as jnp
from jax.experimental import pallas as pl
from jax.experimental.pallas import tpu as pltpu


def _round_up(x, m):
    return ((x + m - 1) // m) * m


def _vmem_budget_bytes():
    """0.8x of queried per-core VMEM capacity (generation-safe headroom)."""
    cap = 64 * 1024 * 1024  # conservative fallback == v7x per-TC physical
    try:
        info = pltpu.get_tpu_info()
        cap = int(getattr(info, "vmem_capacity_bytes", cap))
    except Exception:
        pass
    return int(0.8 * cap)


# ---------------------------- kernels ----------------------------

def _patch_embed_kernel_single(x_ref, w_ref, b_ref, o_ref):
    # Fast path (grid_k == 1, the always-taken case for standard ViT configs):
    # one MXU dot straight into the output block, no accumulator scratch.
    o_ref[...] = (
        jnp.dot(x_ref[...], w_ref[...], preferred_element_type=jnp.float32)
        + b_ref[...]
    ).astype(o_ref.dtype)


def _patch_embed_kernel_multi(x_ref, w_ref, b_ref, o_ref, acc_ref):
    # Reduction path (rare: K = C*P*P > block_k).  W stays fully resident in
    # VMEM (constant index_map -> one-time fetch) and is sliced per K step;
    # bias is folded into the k == 0 accumulator init.
    k = pl.program_id(1)
    tk = x_ref.shape[1]
    off = pl.multiple_of(k * tk, 128)
    partial = jnp.dot(x_ref[...], w_ref[pl.ds(off, tk), :],
                      preferred_element_type=jnp.float32)

    @pl.when(k == 0)
    def _init():
        acc_ref[...] = partial + b_ref[...]

    @pl.when(k > 0)
    def _accum():
        acc_ref[...] += partial

    @pl.when(k == pl.num_programs(1) - 1)
    def _finalize():
        o_ref[...] = acc_ref[...].astype(o_ref.dtype)


# ---------------------------- wrapper ----------------------------

def patch_embeddings_forward(pixel_values, weight, bias, patch_size, *,
                             block_m=None, block_k=1024,
                             compute_dtype=jnp.bfloat16, out_dtype=None):
    """pixel_values: (B, C, H, W) NCHW; weight: (E, C, P, P); bias: (E,).
    Returns (B, num_patches, E), matching PyTorch
    projection(x).flatten(2).transpose(1, 2)."""
    B, C, H, W = pixel_values.shape
    E = weight.shape[0]
    P = patch_size
    Hp, Wp = H // P, W // P
    num_patches = Hp * Wp
    K = C * P * P
    M = B * num_patches

    if out_dtype is None:
        out_dtype = pixel_values.dtype
    in_b = jnp.dtype(compute_dtype).itemsize
    out_b = jnp.dtype(out_dtype).itemsize

    # --- im2col in (c, kh, kw) order to match PyTorch Conv2d weight layout.
    # Cast to compute_dtype FIRST so the extra HBM round trip of X (and the
    # padding below) is paid at compute_dtype width, not f32.
    # TODO(synk): move patch extraction in-kernel (grid over (B, Hp), reading
    # the NCHW image directly) to eliminate this HBM round trip entirely.
    x = pixel_values.astype(compute_dtype)
    x = x.reshape(B, C, Hp, P, Wp, P)
    x = jnp.transpose(x, (0, 2, 4, 1, 3, 5))        # (B, Hp, Wp, C, P, P)
    x = x.reshape(M, K)

    w = weight.astype(compute_dtype).reshape(E, K)

    # --- lane-dense padding of the contraction (K) and output-lane (E) dims.
    K_pad = _round_up(K, 128)
    E_pad = _round_up(E, 128)
    if K_pad <= block_k:
        TK = K_pad
        grid_k = 1
    else:
        TK = _round_up(block_k, 128)
        K_pad = _round_up(K_pad, TK)
        grid_k = K_pad // TK

    if K_pad != K:
        x = jnp.pad(x, ((0, 0), (0, K_pad - K)))
    if K_pad != K or E_pad != E:
        w = jnp.pad(w, ((0, E_pad - E), (0, K_pad - K)))
    w = w.T                                          # (K_pad, E_pad): out = X @ W
    b = bias
    if E_pad != E:
        b = jnp.pad(b, (0, E_pad - E))
    b = b.reshape(1, E_pad).astype(jnp.float32)

    # --- M tiling sized from the VMEM budget; grid_m >= 2 so the "parallel"
    # axis shards across both v7x TensorCores; M padded to grid_m * TM so
    # every tile is full (unmasked stores, no garbage rows into the MXU).
    budget = _vmem_budget_bytes()
    fixed = (2 * K_pad * E_pad * in_b        # W (double-buffered by default)
             + 2 * 8 * E_pad * 4             # bias
             + (2 << 20))                    # Mosaic internal scratch slack
    per_row = (2 * TK * in_b                 # X tile, double-buffered
               + 2 * E_pad * out_b           # output tile, double-buffered
               + (E_pad * 4 if grid_k > 1 else 0))   # f32 accumulator
    tm_cap = max(8, min(2048, ((budget - fixed) // per_row) // 8 * 8))
    if block_m is not None:
        tm_cap = min(tm_cap, max(8, _round_up(block_m, 8)))

    grid_m = max(2, pl.cdiv(M, tm_cap))
    TM = _round_up(pl.cdiv(M, grid_m), 8)
    M_pad = grid_m * TM
    if M_pad != M:
        x = jnp.pad(x, ((0, M_pad - M), (0, 0)))

    cost = pl.CostEstimate(
        flops=2 * M_pad * K_pad * E_pad,
        transcendentals=0,
        bytes_accessed=(M_pad * K_pad + K_pad * E_pad) * in_b
                       + M_pad * E_pad * out_b + E_pad * 4,
    )
    compiler_params = pltpu.CompilerParams(
        dimension_semantics=(("parallel",) if grid_k == 1
                             else ("parallel", "arbitrary")),
        vmem_limit_bytes=int(budget),
    )

    if grid_k == 1:
        kernel = _patch_embed_kernel_single
        grid_spec = pltpu.PrefetchScalarGridSpec(
            num_scalar_prefetch=0,
            grid=(grid_m,),
            in_specs=[
                pl.BlockSpec((TM, K_pad), lambda i: (i, 0)),
                pl.BlockSpec((K_pad, E_pad), lambda i: (0, 0)),
                pl.BlockSpec((1, E_pad), lambda i: (0, 0)),
            ],
            out_specs=pl.BlockSpec((TM, E_pad), lambda i: (i, 0)),
        )
    else:
        kernel = _patch_embed_kernel_multi
        grid_spec = pltpu.PrefetchScalarGridSpec(
            num_scalar_prefetch=0,
            grid=(grid_m, grid_k),                   # reduction axis last
            in_specs=[
                pl.BlockSpec((TM, TK), lambda i, k: (i, k)),
                pl.BlockSpec((K_pad, E_pad), lambda i, k: (0, 0)),   # resident W
                pl.BlockSpec((1, E_pad), lambda i, k: (0, 0)),
            ],
            out_specs=pl.BlockSpec((TM, E_pad), lambda i, k: (i, 0)),
            scratch_shapes=[pltpu.VMEM((TM, E_pad), jnp.float32)],
        )

    out = pl.pallas_call(
        kernel,
        out_shape=jax.ShapeDtypeStruct((M_pad, E_pad), out_dtype),
        grid_spec=grid_spec,
        compiler_params=compiler_params,
        cost_estimate=cost,
    )(x, w, b)

    out = out[:M, :E]
    return out.reshape(B, num_patches, E)


def reference_forward(pixel_values, weight, bias, patch_size):
    """Pure-JAX reference: strided conv == lax.conv_general_dilated."""
    y = jax.lax.conv_general_dilated(
        pixel_values, weight,
        window_strides=(patch_size, patch_size),
        padding="VALID",
        dimension_numbers=("NCHW", "OIHW", "NCHW"),
    ) + bias.reshape(1, -1, 1, 1)
    B, E, Hp, Wp = y.shape
    return jnp.transpose(y.reshape(B, E, Hp * Wp), (0, 2, 1))


if __name__ == "__main__":
    key = jax.random.PRNGKey(0)
    k_x, k_w, k_b = jax.random.split(key, 3)

    # Small shapes consistent with the module:
    # image_size=16, patch_size=4, num_channels=4, embed_dim=32.
    B, C, H, W = 2, 4, 16, 16
    P, E = 4, 32
    pixel_values = jax.random.normal(k_x, (B, C, H, W), dtype=jnp.float32)
    weight = jax.random.normal(k_w, (E, C, P, P), dtype=jnp.float32) * 0.02
    bias = jax.random.normal(k_b, (E,), dtype=jnp.float32) * 0.02
    ref = reference_forward(pixel_values, weight, bias, P)

    # 1) f32-compute, grid_k == 1 fast path; block_m=16 forces a multi-tile M
    #    grid so the tiled / padded / pipelined path is exercised at toy size.
    out_f32 = patch_embeddings_forward(pixel_values, weight, bias, P,
                                       block_m=16, compute_dtype=jnp.float32)
    out_f32 = jax.block_until_ready(out_f32)
    assert out_f32.shape == (B, (H // P) * (W // P), E), out_f32.shape
    assert jnp.allclose(out_f32, ref, atol=1e-4, rtol=1e-4), "f32 mismatch"

    # 2) default bf16-compute path (recommended for production shapes).
    out_bf16 = patch_embeddings_forward(pixel_values, weight, bias, P)
    out_bf16 = jax.block_until_ready(out_bf16)
    assert out_bf16.shape == ref.shape
    assert jnp.allclose(out_bf16, ref, atol=5e-2, rtol=5e-2), "bf16 mismatch"

    # 3) K-reduction path (grid_k > 1): patch_size=8 -> K=256 with block_k=128.
    P2, E2 = 8, 32
    k_w2, k_b2 = jax.random.split(k_w)
    weight2 = jax.random.normal(k_w2, (E2, C, P2, P2), dtype=jnp.float32) * 0.02
    bias2 = jax.random.normal(k_b2, (E2,), dtype=jnp.float32) * 0.02
    out_multi = patch_embeddings_forward(pixel_values, weight2, bias2, P2,
                                         block_k=128, compute_dtype=jnp.float32)
    out_multi = jax.block_until_ready(out_multi)
    ref2 = reference_forward(pixel_values, weight2, bias2, P2)
    assert out_multi.shape == ref2.shape, (out_multi.shape, ref2.shape)
    assert jnp.allclose(out_multi, ref2, atol=1e-4, rtol=1e-4), "multi-k mismatch"

    print("KERNEL_OK")
</pallas_src>

<mosaic_0001>
module attributes {stable_mosaic.version = 11 : i64} {
  func.func @_patch_embed_kernel_single(%arg0: i32, %arg1: memref<16x128xf32, #tpu.memory_space<vmem>>, %arg2: memref<128x128xf32, #tpu.memory_space<vmem>>, %arg3: memref<1x128xf32, #tpu.memory_space<vmem>>, %arg4: memref<16x128xf32, #tpu.memory_space<vmem>>) attributes {dimension_semantics = [#tpu.dimension_semantics<parallel>], iteration_bounds = array<i64: 2>, scalar_prefetch = 0 : i64, scratch_operands = 0 : i64, tpu.core_type = #tpu.core_type<tc>, window_params = [{transform_indices = @transform_0, window_bounds = array<i64: 16, 128>}, {pipeline_mode = #tpu.pipeline_mode<synchronous>, transform_indices = @transform_1, window_bounds = array<i64: 128, 128>}, {pipeline_mode = #tpu.pipeline_mode<synchronous>, transform_indices = @transform_2, window_bounds = array<i64: 1, 128>}, {transform_indices = @transform_3, window_bounds = array<i64: 16, 128>}]} {
    %c0 = arith.constant 0 : index
    %c0_0 = arith.constant 0 : index
    %0 = vector.load %arg1[%c0, %c0_0] : memref<16x128xf32, #tpu.memory_space<vmem>>, vector<16x128xf32>
    %c0_1 = arith.constant 0 : index
    %c0_2 = arith.constant 0 : index
    %1 = vector.load %arg2[%c0_1, %c0_2] : memref<128x128xf32, #tpu.memory_space<vmem>>, vector<128x128xf32>
    %cst = arith.constant dense<0.000000e+00> : vector<16x128xf32>
    %2 = tpu.matmul %0, %1, %cst {dimension_numbers = #tpu.dot_dimension_numbers<[1], [0], [0], [1], [0, 0, 1, 1], [], []>} : vector<16x128xf32>, vector<128x128xf32>, vector<16x128xf32> -> vector<16x128xf32>
    %c0_3 = arith.constant 0 : index
    %c0_4 = arith.constant 0 : index
    %3 = vector.load %arg3[%c0_3, %c0_4] : memref<1x128xf32, #tpu.memory_space<vmem>>, vector<1x128xf32>
    %4 = vector.broadcast %3 : vector<1x128xf32> to vector<16x128xf32>
    %5 = arith.addf %2, %4 : vector<16x128xf32>
    %c0_5 = arith.constant 0 : index
    %c0_6 = arith.constant 0 : index
    %6 = vector.load %arg4[%c0_5, %c0_6] : memref<16x128xf32, #tpu.memory_space<vmem>>, vector<16x128xf32>
    tpu.vector_store %arg4[%c0_5, %c0_6], %5 {strides = array<i32>} : memref<16x128xf32, #tpu.memory_space<vmem>>, vector<16x128xf32>,
    return
  }
  func.func @transform_0(%arg0: i32) -> (i32, i32) {
    %c0_i32 = arith.constant 0 : i32
    %c0_i32_0 = arith.constant 0 : i32
    return %arg0, %c0_i32 : i32, i32
  }
  func.func @transform_1(%arg0: i32) -> (i32, i32) {
    %c0_i32 = arith.constant 0 : i32
    %c0_i32_0 = arith.constant 0 : i32
    %c0_i32_1 = arith.constant 0 : i32
    return %c0_i32, %c0_i32_0 : i32, i32
  }
  func.func @transform_2(%arg0: i32) -> (i32, i32) {
    %c0_i32 = arith.constant 0 : i32
    %c0_i32_0 = arith.constant 0 : i32
    %c0_i32_1 = arith.constant 0 : i32
    return %c0_i32, %c0_i32_0 : i32, i32
  }
  func.func @transform_3(%arg0: i32) -> (i32, i32) {
    %c0_i32 = arith.constant 0 : i32
    %c0_i32_0 = arith.constant 0 : i32
    return %arg0, %c0_i32 : i32, i32
  }
}

</mosaic_0001>

<llo_original>
// kernel: tpu_custom_call.1
$region0: #{tpu_custom_call.1}
  #allocation0 [shape = 'u32[]', space=smem, size = 0x4, offset = 0x4, fixed_abs, tag = 'smem constant byte address 0x4 - core index']
  #allocation1 [shape = 'u32[72,128]{1,0:T(1,128)}', space=vmem, size = 0x9000, scoped, tag = 'internal scratch']
  %s0 = inlined_call_operand.hbm [shape: f32[32,128], index: 0, kind: input, shape index: {}]
  %s1 = inlined_call_operand.hbm [shape: f32[128,128], index: 1, kind: input, shape index: {}]
  %s2 = inlined_call_operand.vmem [shape: f32[1,128], index: 2, kind: input, shape index: {}]
  %s3 = inlined_call_operand.hbm [shape: f32[32,128], index: 3, kind: output, shape index: {}]
  %s4 = sld [smem:[#allocation0]]
  $region53: #{tpu_custom_call.1} parent=0
    _
  %s6 = ssub.s32 1, %s4
  %s7 = scalar_select 0, %s6, %s4
  $region1: #{tpu_custom_call.1} parent=0
    #allocation2 [shape = 'u8[16384]{0}', space=vmem, size = 0x4000, scoped, tag = 'input window, operand 0']
    #allocation3 [shape = 's32[2]{0}', space=sflag, size = 0x8, scoped, tag = 'scoped memory for tpu_custom_call.1']
    #allocation4 [shape = 's32[2]{0}', space=sflag, size = 0x8, scoped, tag = 'scoped memory for tpu_custom_call.1']
    #allocation5 [shape = 'u8[65536]{0}', space=vmem, size = 0x10000, scoped, tag = 'input window, operand 1, single buffered']
    #allocation6 [shape = 's32[1]{0}', space=sflag, size = 0x4, scoped, tag = 'scoped memory for tpu_custom_call.1']
    #allocation7 [shape = 'u8[16384]{0}', space=vmem, size = 0x4000, scoped, tag = 'output window, operand 0']
    %8 = vsyncpa [#allocation3], 0
    %s9 = scalar_lea.sflag [#allocation3], 1
    %10 = vsyncpa %s9, 0
    %11 = vsyncpa [#allocation6], 0
    %12 = vsyncpa [#allocation4], 0
    %s13 = scalar_lea.sflag [#allocation4], 1
    %14 = vsyncpa %s13, 0
    loop: start=0, step=1, limit=4
    $region2: #{tpu_custom_call.1} parent=1 // loop_pre_header
      _
    $region3: #{tpu_custom_call.1} parent=1 // loop_header
      %s16 = sphi 0, %s20
      %p17 = scmp.ge.s32.totalorder %s16, 4
      %s26 = sphi 0, %s28
      %s29 = sphi 0, %s26
      %s30 = sphi 0, %s29
      %s46 = sphi 0, %s30
      %s50 = sphi 0, %s50
      %s52 = sphi 0, %s50
      %s53 = sphi 0, %s52
      %s67 = sphi 0, %s53
      %s71 = sphi 0, %s71
      %s73 = sphi 0, %s71
      %s74 = sphi 0, %s73
      %s88 = sphi 0, %s74
      %s94 = sphi 0, %s96
      %s97 = sphi 0, %s94
      %s98 = sphi 0, %s97
      %s114 = sphi 0, %s98
    $region4: #{tpu_custom_call.1} parent=1 // loop_header_branch
      %19 = sbr.rel (%p17) target = $region8
    $region5: #{tpu_custom_call.1} parent=1 // loop_body
      %s21 = ssub.s32 %s16, 1
      %s22 = ssub.s32 %s16, 2
      %s23 = sadd.s32 %s16, 1
      %s24 = ssub.s32 %s16, %s23
      %p25 = scmp.eq.s32.totalorder %s24, 0
      %s27 = sadd.s32 %s26, 1
      %s28 = scalar_select %p25, %s26, %s27
      %p31 = pneg %p25
      %p32 = scmp.eq.s32.totalorder %s16, 1
      %p33 = por %p31, %p32
      %p34 = scmp.ne.s32.totalorder %s26, %s29
      %p35 = scmp.eq.s32.totalorder %s16, 0
      %p36 = por %p34, %p35
      %p37 = scmp.ne.s32.totalorder %s26, %s29
      %p38 = scmp.eq.s32.totalorder %s21, 1
      %p39 = por %p37, %p38
      %p40 = scmp.ne.s32.totalorder %s29, %s30
      %p41 = scmp.eq.s32.totalorder %s21, 0
      %p42 = por %p40, %p41
      %p43 = scmp.ne.s32.totalorder %s29, %s30
      %p44 = scmp.eq.s32.totalorder %s22, 1
      %p45 = por %p43, %p44
      %p47 = scmp.ne.s32.totalorder %s30, %s46
      %p48 = scmp.eq.s32.totalorder %s22, 0
      %p49 = por %p47, %p48
      %s51 = sadd.s32 %s50, 1
      %p54 = scmp.eq.s32.totalorder %s16, 1
      %p55 = scmp.ne.s32.totalorder %s50, %s52
      %p56 = scmp.eq.s32.totalorder %s16, 0
      %p57 = por %p55, %p56
      %p58 = scmp.ne.s32.totalorder %s50, %s52
      %p59 = scmp.eq.s32.totalorder %s21, 1
      %p60 = por %p58, %p59
      %p61 = scmp.ne.s32.totalorder %s52, %s53
      %p62 = scmp.eq.s32.totalorder %s21, 0
      %p63 = por %p61, %p62
      %p64 = scmp.ne.s32.totalorder %s52, %s53
      %p65 = scmp.eq.s32.totalorder %s22, 1
      %p66 = por %p64, %p65
      %p68 = scmp.ne.s32.totalorder %s53, %s67
      %p69 = scmp.eq.s32.totalorder %s22, 0
      %p70 = por %p68, %p69
      %s72 = sadd.s32 %s71, 1
      %p75 = scmp.eq.s32.totalorder %s16, 1
      %p76 = scmp.ne.s32.totalorder %s71, %s73
      %p77 = scmp.eq.s32.totalorder %s16, 0
      %p78 = por %p76, %p77
      %p79 = scmp.ne.s32.totalorder %s71, %s73
      %p80 = scmp.eq.s32.totalorder %s21, 1
      %p81 = por %p79, %p80
      %p82 = scmp.ne.s32.totalorder %s73, %s74
      %p83 = scmp.eq.s32.totalorder %s21, 0
      %p84 = por %p82, %p83
      %p85 = scmp.ne.s32.totalorder %s73, %s74
      %p86 = scmp.eq.s32.totalorder %s22, 1
      %p87 = por %p85, %p86
      %p89 = scmp.ne.s32.totalorder %s74, %s88
      %p90 = scmp.eq.s32.totalorder %s22, 0
      %p91 = por %p89, %p90
      %s92 = ssub.s32 %s16, %s23
      %p93 = scmp.eq.s32.totalorder %s92, 0
      %s95 = sadd.s32 %s94, 1
      %s96 = scalar_select %p93, %s94, %s95
      %p99 = pneg %p93
      %p100 = scmp.eq.s32.totalorder %s16, 1
      %p101 = por %p99, %p100
      %p102 = scmp.ne.s32.totalorder %s94, %s97
      %p103 = scmp.eq.s32.totalorder %s16, 0
      %p104 = por %p102, %p103
      %p105 = scmp.ne.s32.totalorder %s94, %s97
      %p106 = scmp.eq.s32.totalorder %s21, 1
      %p107 = por %p105, %p106
      %p108 = scmp.ne.s32.totalorder %s97, %s98
      %p109 = scmp.eq.s32.totalorder %s21, 0
      %p110 = por %p108, %p109
      %p111 = scmp.ne.s32.totalorder %s97, %s98
      %p112 = scmp.eq.s32.totalorder %s22, 1
      %p113 = por %p111, %p112
      %p115 = scmp.ne.s32.totalorder %s98, %s114
      %p116 = scmp.eq.s32.totalorder %s22, 0
      %p117 = por %p115, %p116
      %p118 = scmp.le.s32.totalorder 1, %s16
      %p119 = scmp.lt.s32.totalorder %s16, 3
      %p120 = pnand %p118, %p119
      %p121 = pneg %p120
      // Predicated region
      $region9: #{tpu_custom_call.1} parent=5 // pred_check
        _
      $region10: #{tpu_custom_call.1} parent=5 // pred_check_branch
        %123 = sbr.rel (%p120) target = $region12
      $region11: #{tpu_custom_call.1} parent=5 // pred_region
        %s124 = ssub.s32 %s16, 1
        // Predicated region
        $region13: #{tpu_custom_call.1} parent=11 // pred_check
          %p125 = pneg %p63
        $region14: #{tpu_custom_call.1} parent=11 // pred_check_branch
          %127 = sbr.rel (%p125) target = $region16
        $region15: #{tpu_custom_call.1} parent=11 // pred_region
          %129 = vsyncadd [#allocation6], 0
          %s130 = sshll.u32 %s1, 4
          %s131 = int_to_ptr.hbm [resolvable:$true] %s130
          %s132 = sshll.u32 [#allocation5], 4
          %s133 = int_to_ptr.vmem [resolvable:$true] %s132
          %138 = dma.hbm_to_vmem [thread:$0]  %s131, 2048, %s133, [#allocation6], 128, 128, 8
        $region16: #{tpu_custom_call.1} parent=11 // pred_fallthru
          _
        // Predicated region
        $region17: #{tpu_custom_call.1} parent=11 // pred_check
          %p139 = pneg %p84
        $region18: #{tpu_custom_call.1} parent=11 // pred_check_branch
          %141 = sbr.rel (%p139) target = $region20
        $region19: #{tpu_custom_call.1} parent=11 // pred_region
          _
        $region20: #{tpu_custom_call.1} parent=11 // pred_fallthru
          _
      $region12: #{tpu_custom_call.1} parent=5 // pred_fallthru
        _
      %p142 = scmp.lt.s32.totalorder %s16, 2
      // Predicated region
      $region21: #{tpu_custom_call.1} parent=5 // pred_check
        %p143 = pneg %p142
      $region22: #{tpu_custom_call.1} parent=5 // pred_check_branch
        %145 = sbr.rel (%p143) target = $region24
      $region23: #{tpu_custom_call.1} parent=5 // pred_region
        // Predicated region
        $region25: #{tpu_custom_call.1} parent=23 // pred_check
          %p146 = pneg %p36
        $region26: #{tpu_custom_call.1} parent=23 // pred_check_branch
          %148 = sbr.rel (%p146) target = $region28
        $region27: #{tpu_custom_call.1} parent=23 // pred_region
          %s149 = sand.u32 %s26, 1
          %s150 = scalar_lea.sflag [#allocation3], %s149
          %s151 = sand.u32 %s26, 1
          %s152 = smul.addr %s151, 16
          %s153 = scalar_lea.vmem [#allocation2], %s152
          %s154 = smul.u32 2, %s16
          %156 = vsyncadd %s150, 0
          %s157 = smul.addr %s154, 8
          %s158 = scalar_lea.hbm %s0, %s157
          %s159 = sshll.u32 %s158, 4
          %s160 = int_to_ptr.hbm [resolvable:$true] %s159
          %s161 = sshll.u32 %s153, 4
          %s162 = int_to_ptr.vmem [resolvable:$true] %s161
          %167 = dma.hbm_to_vmem [thread:$0]  %s160, 256, %s162, %s150, 128, 128, 8
        $region28: #{tpu_custom_call.1} parent=23 // pred_fallthru
          _
      $region24: #{tpu_custom_call.1} parent=5 // pred_fallthru
        _
      %p168 = scmp.le.s32.totalorder 1, %s16
      %p169 = scmp.lt.s32.totalorder %s16, 3
      %p170 = pnand %p168, %p169
      %p171 = pneg %p170
      // Predicated region
      $region29: #{tpu_custom_call.1} parent=5 // pred_check
        _
      $region30: #{tpu_custom_call.1} parent=5 // pred_check_branch
        %173 = sbr.rel (%p170) target = $region32
      $region31: #{tpu_custom_call.1} parent=5 // pred_region
        %s174 = ssub.s32 %s16, 1
        %s175 = sand.u32 %s29, 1
        %s176 = scalar_lea.sflag [#allocation3], %s175
        %s177 = sand.u32 %s29, 1
        %s178 = smul.addr %s177, 16
        %s179 = scalar_lea.vmem [#allocation2], %s178
        // Predicated region
        $region33: #{tpu_custom_call.1} parent=31 // pred_check
          %p180 = pneg %p42
        $region34: #{tpu_custom_call.1} parent=31 // pred_check_branch
          %182 = sbr.rel (%p180) target = $region36
        $region35: #{tpu_custom_call.1} parent=31 // pred_region
          %184 = dma.done %s176, 256
        $region36: #{tpu_custom_call.1} parent=31 // pred_fallthru
          _
        // Predicated region
        $region37: #{tpu_custom_call.1} parent=31 // pred_check
          %p185 = pneg %p63
        $region38: #{tpu_custom_call.1} parent=31 // pred_check_branch
          %187 = sbr.rel (%p185) target = $region40
        $region39: #{tpu_custom_call.1} parent=31 // pred_region
          %189 = dma.done [#allocation6], 2048
        $region40: #{tpu_custom_call.1} parent=31 // pred_fallthru
          _
        %s190 = sand.u32 %s29, 1
        %s191 = scalar_lea.sflag [#allocation3], %s190
        %s192 = sand.u32 %s29, 1
        %s193 = smul.addr %s192, 16
        %s194 = scalar_lea.vmem [#allocation2], %s193
        %p195 = pneg %p42
        %p196 = pneg %p39
        %p197 = pneg %p63
        %p198 = pneg %p60
        %p199 = pneg %p84
        %p200 = pneg %p81
        %p201 = pneg %p110
        %p202 = pneg %p107
        %s203 = sand.u32 %s97, 1
        %s204 = scalar_lea.sflag [#allocation4], %s203
        %s205 = sand.u32 %s97, 1
        %s206 = smul.addr %s205, 16
        %s207 = scalar_lea.vmem [#allocation7], %s206
        %s208 = smul.u32 2, %s21
        %s209 = smul.u32 2, %s21
        %v210 = vld [vmem:[%s179] sm:$0xff]
        %v211 = vld [vmem:[%s179 + $0x8] sm:$0xff]
        %v212 = vld [vmem:[#allocation5] sm:$0xff]
        %v213 = vld [vmem:[#allocation5 + $0x8] sm:$0xff]
        %v214 = vld [vmem:[#allocation5 + $0x10] sm:$0xff]
        %v215 = vld [vmem:[#allocation5 + $0x18] sm:$0xff]
        %v216 = vld [vmem:[#allocation5 + $0x20] sm:$0xff]
        %v217 = vld [vmem:[#allocation5 + $0x28] sm:$0xff]
        %v218 = vld [vmem:[#allocation5 + $0x30] sm:$0xff]
        %v219 = vld [vmem:[#allocation5 + $0x38] sm:$0xff]
        %v220 = vld [vmem:[#allocation5 + $0x40] sm:$0xff]
        %v221 = vld [vmem:[#allocation5 + $0x48] sm:$0xff]
        %v222 = vld [vmem:[#allocation5 + $0x50] sm:$0xff]
        %v223 = vld [vmem:[#allocation5 + $0x58] sm:$0xff]
        %v224 = vld [vmem:[#allocation5 + $0x60] sm:$0xff]
        %v225 = vld [vmem:[#allocation5 + $0x68] sm:$0xff]
        %v226 = vld [vmem:[#allocation5 + $0x70] sm:$0xff]
        %v227 = vld [vmem:[#allocation5 + $0x78] sm:$0xff]
        %v228 = vld [vmem:[%s2] sm:$0x1]
        %v230 = vperm.slane %v228, 0
        %232 = vmatpush.msra.mxu0 %v227
        %233 = vmatpush.msra.mxu0 %v226
        %234 = vmatpush.msra.mxu0 %v225
        %235 = vmatpush.msra.mxu0 %v224
        %236 = vmatpush.msra.mxu0 %v223
        %237 = vmatpush.msra.mxu0 %v222
        %238 = vmatpush.msra.mxu0 %v221
        %239 = vmatpush.msra.mxu0 %v220
        %240 = vmatpush.msra.mxu0 %v219
        %241 = vmatpush.msra.mxu0 %v218
        %242 = vmatpush.msra.mxu0 %v217
        %243 = vmatpush.msra.mxu0 %v216
        %244 = vmatpush.msra.mxu0 %v215
        %245 = vmatpush.msra.mxu0 %v214
        %246 = vmatpush.msra.mxu0 %v213
        %247 = vmatpush.msra.mxu0 %v212
        %248 = vmatmul.f32.gmra.mxu0 %v210
        %v249 = vpop.f32.mrf.mxu0
        %v250 = vadd.f32 %v230, %v249
        %251 = vmatmul.f32.gmra.mxu0 %v211
        %v252 = vpop.f32.mrf.mxu0
        %v253 = vadd.f32 %v230, %v252
        %254 = vdwg.mxu0
        %255 = vst [vmem:[%s207] sm:$0xff] %v250
        %256 = vst [vmem:[%s207 + $0x8] sm:$0xff] %v253
        %s257 = sand.u32 %s97, 1
        %s258 = scalar_lea.sflag [#allocation4], %s257
        %s259 = sand.u32 %s97, 1
        %s260 = smul.addr %s259, 16
        %s261 = scalar_lea.vmem [#allocation7], %s260
        // Predicated region
        $region41: #{tpu_custom_call.1} parent=31 // pred_check
          %p262 = pneg %p107
        $region42: #{tpu_custom_call.1} parent=31 // pred_check_branch
          %264 = sbr.rel (%p262) target = $region44
        $region43: #{tpu_custom_call.1} parent=31 // pred_region
          %s265 = smul.u32 2, %s21
          %267 = vsyncadd %s258, 0
          %s268 = smul.addr %s265, 8
          %s269 = scalar_lea.hbm %s3, %s268
          %s270 = sshll.u32 %s261, 4
          %s271 = int_to_ptr.vmem [resolvable:$true] %s270
          %s272 = sshll.u32 %s269, 4
          %s273 = int_to_ptr.hbm [resolvable:$true] %s272
          %278 = dma.vmem_to_hbm [thread:$0]  %s271, 256, %s273, %s258, 128, 128, 8
        $region44: #{tpu_custom_call.1} parent=31 // pred_fallthru
          _
      $region32: #{tpu_custom_call.1} parent=5 // pred_fallthru
        _
      %p279 = scmp.le.s32.totalorder 2, %s16
      // Predicated region
      $region45: #{tpu_custom_call.1} parent=5 // pred_check
        %p280 = pneg %p279
      $region46: #{tpu_custom_call.1} parent=5 // pred_check_branch
        %282 = sbr.rel (%p280) target = $region48
      $region47: #{tpu_custom_call.1} parent=5 // pred_region
        %s283 = ssub.s32 %s16, 2
        // Predicated region
        $region49: #{tpu_custom_call.1} parent=47 // pred_check
          %p284 = pneg %p113
        $region50: #{tpu_custom_call.1} parent=47 // pred_check_branch
          %286 = sbr.rel (%p284) target = $region52
        $region51: #{tpu_custom_call.1} parent=47 // pred_region
          %s287 = sand.u32 %s98, 1
          %s288 = scalar_lea.sflag [#allocation4], %s287
          %s289 = sand.u32 %s98, 1
          %s290 = smul.addr %s289, 16
          %s291 = scalar_lea.vmem [#allocation7], %s290
          %293 = dma.done %s288, 256
        $region52: #{tpu_custom_call.1} parent=47 // pred_fallthru
          _
      $region48: #{tpu_custom_call.1} parent=5 // pred_fallthru
        _
    $region6: #{tpu_custom_call.1} parent=1 // loop_footer
      %s20 = sadd.s32 1, %s16
    $region7: #{tpu_custom_call.1} parent=1 // loop_footer_branch
      %15 = sbr.rel target = $region3
    $region8: #{tpu_custom_call.1} parent=1 // loop_exit
      _
    %294 = vsyncpa [#allocation3], 1
    %s295 = scalar_lea.sflag [#allocation3], 1
    %296 = vsyncpa %s295, 1
    %297 = vsyncpa [#allocation6], 1
    %298 = vsyncpa [#allocation4], 1
    %s299 = scalar_lea.sflag [#allocation4], 1
    %300 = vsyncpa %s299, 1

</llo_original>
